<compile_context>
chip_gen: v7x
topology: tpu7x:2x2x1
jax: 0.10.0
libtpu: 0.0.40
codegen_flags: <defaults>
</compile_context>

<pallas_src>
import jax
import jax.numpy as jnp
from jax.experimental import pallas as pl
from jax.experimental.pallas import tpu as pltpu

LEAKY_SLOPE = 0.01   # nn.LeakyReLU() default negative_slope
LANE = 128           # lane width (last-dim alignment)


def _round_up(x, m):
    return ((x + m - 1) // m) * m


def _sublane(dtype):
    # Second-minor tiling multiple: 8 for 4-byte, 16 for 2-byte, 32 for 1-byte.
    return max(8, 32 // jnp.dtype(dtype).itemsize)


def _vmem_budget_bytes():
    # Per-generation VMEM budget with ~20% headroom for the compiler.
    # v6e/v5e: 128 MiB physical -> ~102 MiB budget; v7x: 64 MiB/TC -> ~51 MiB.
    cap = 64 * 1024 * 1024
    try:
        info = pltpu.get_tpu_info()
        cap = int(getattr(info, "vmem_capacity_bytes", cap))
    except Exception:
        pass
    return int(cap * 0.8)


def _autoencoder_kernel(x_ref, we_ref, be_ref, wd_ref, bd_ref, o_ref):
    # Encoder: (TB, D_pad) @ (D_pad, H_pad) -> f32 accumulation on the MXU.
    enc = jnp.dot(x_ref[...], we_ref[...], preferred_element_type=jnp.float32)
    # Fused f32 bias add + single cast back to the compute dtype for the decoder matmul.
    enc = (enc + be_ref[...]).astype(wd_ref.dtype)
    # Decoder: (TB, H_pad) @ (H_pad, D_pad) -> f32 accumulation.
    dec = jnp.dot(enc, wd_ref[...], preferred_element_type=jnp.float32)
    dec = dec + bd_ref[...]
    # LeakyReLU (negative_slope = 0.01); dropout is identity in eval mode.
    act = jnp.where(dec >= 0.0, dec, LEAKY_SLOPE * dec)
    o_ref[...] = act.astype(o_ref.dtype)


def prepare_autoencoder_params(w_enc, b_enc, w_dec, b_dec, *,
                               compute_dtype=jnp.bfloat16):
    """Pad/cast the parameters once (hoisted out of the per-call path).

    w_enc: (D_in, H); b_enc: (H,)|(1,H); w_dec: (H, D_in); b_dec: (D_in,)|(1,D_in).
    Weights are stored transposed vs. PyTorch (kernel computes plain x @ W + b).
    """
    D_in, H = w_enc.shape
    D_pad = _round_up(D_in, LANE)
    H_pad = _round_up(H, LANE)

    if D_pad == D_in and H_pad == H:
        we_p = w_enc.astype(compute_dtype)
        wd_p = w_dec.astype(compute_dtype)
        be_p = jnp.reshape(b_enc, (1, H)).astype(jnp.float32)
        bd_p = jnp.reshape(b_dec, (1, D_in)).astype(jnp.float32)
    else:
        # Zero padding is exact: padded rows/cols contribute nothing to real outputs.
        we_p = jnp.zeros((D_pad, H_pad), compute_dtype).at[:D_in, :H].set(
            w_enc.astype(compute_dtype))
        wd_p = jnp.zeros((H_pad, D_pad), compute_dtype).at[:H, :D_in].set(
            w_dec.astype(compute_dtype))
        be_p = jnp.zeros((1, H_pad), jnp.float32).at[:, :H].set(
            jnp.reshape(b_enc, (1, H)).astype(jnp.float32))
        bd_p = jnp.zeros((1, D_pad), jnp.float32).at[:, :D_in].set(
            jnp.reshape(b_dec, (1, D_in)).astype(jnp.float32))

    return {"we": we_p, "be": be_p, "wd": wd_p, "bd": bd_p,
            "d_in": D_in, "h": H, "compute_dtype": compute_dtype}


def autoencoder_forward(x, params, *, training=False, out_dtype=None,
                        batch_tile_cap=1024):
    """x: (B, D_in). `params` comes from prepare_autoencoder_params()."""
    if training:
        # TODO(synk): stochastic training-mode dropout (p=0.1) not implemented.
        raise NotImplementedError("training-mode dropout (p=0.1) is not implemented")

    we_p, be_p, wd_p, bd_p = params["we"], params["be"], params["wd"], params["bd"]
    D_in, H = params["d_in"], params["h"]
    compute_dtype = params["compute_dtype"]
    D_pad, H_pad = we_p.shape

    B = x.shape[0]
    out_dtype = x.dtype if out_dtype is None else out_dtype
    cbytes = jnp.dtype(compute_dtype).itemsize
    obytes = jnp.dtype(out_dtype).itemsize

    # Sublane alignment required by both the compute-dtype and output blocks.
    sub = max(_sublane(compute_dtype), _sublane(out_dtype))

    # ---- VMEM-budget-driven batch-tile selection -------------------------------
    budget = _vmem_budget_bytes()
    bytes_weights = (D_pad * H_pad + H_pad * D_pad) * cbytes   # single-buffered
    bytes_bias = (H_pad + D_pad) * 4
    fixed = bytes_weights + bytes_bias
    if fixed > budget:
        # TODO(synk): stream weight tiles (K/N-tiled fallback with pl.when-guarded
        #             f32 accumulator) for feature dims whose resident weights
        #             overflow the v7x 64 MiB/TC VMEM.
        raise NotImplementedError("resident weights exceed the VMEM budget")

    # Per-batch-row VMEM: double-buffered x tile + out tile, plus f32 intermediates.
    per_row = 2 * D_pad * cbytes + 2 * D_pad * obytes + 4 * (H_pad + D_pad)
    tb_fit = max((budget - fixed) // per_row, sub)
    tb_fit = max((tb_fit // sub) * sub, sub)
    cap = max(_round_up(int(batch_tile_cap), sub), sub)

    # Pad the batch only to the sublane multiple (<= sub-1 wasted rows); partial
    # trailing blocks are handled by the pipeline (padded rows are sliced off).
    B_pad = _round_up(B, sub)
    TB = max(min(B_pad, cap, tb_fit), sub)
    # Keep at least 2 grid steps when the batch allows it (lets v7x's two
    # TensorCores split the "parallel" axis; negligible cost elsewhere).
    if B_pad >= 2 * sub and pl.cdiv(B_pad, TB) == 1:
        TB = min(TB, _round_up((B_pad + 1) // 2, sub))
    grid = (pl.cdiv(B_pad, TB),)

    # ---- input prep (only materialize a padded copy when actually needed) ------
    needs_pad = (B_pad != B) or (D_pad != D_in)
    x_c = x if x.dtype == compute_dtype else x.astype(compute_dtype)
    if needs_pad:
        x_p = jnp.zeros((B_pad, D_pad), compute_dtype).at[:B, :D_in].set(x_c)
    else:
        x_p = x_c

    # ---- VMEM limit & advisory cost --------------------------------------------
    vmem_needed = fixed + TB * per_row
    vmem_limit = int(min(max(2 * vmem_needed, 16 * 1024 * 1024), budget))

    flops = 2 * B_pad * (D_pad * H_pad + H_pad * D_pad)
    bytes_accessed = (B_pad * D_pad * cbytes          # x
                      + bytes_weights + bytes_bias    # params (read once)
                      + B_pad * D_pad * obytes)       # output
    cost = pl.CostEstimate(flops=flops, transcendentals=0,
                           bytes_accessed=bytes_accessed)

    resident = pl.Buffered(1)   # constant index_map -> single buffer, no re-DMA

    out_padded = pl.pallas_call(
        _autoencoder_kernel,
        out_shape=jax.ShapeDtypeStruct((B_pad, D_pad), out_dtype),
        grid=grid,
        in_specs=[
            pl.BlockSpec((TB, D_pad), lambda i: (i, 0)),      # x: tiled over batch
            pl.BlockSpec((D_pad, H_pad), lambda i: (0, 0),    # w_enc: VMEM-resident
                         pipeline_mode=resident),
            pl.BlockSpec((1, H_pad), lambda i: (0, 0),        # b_enc
                         pipeline_mode=resident),
            pl.BlockSpec((H_pad, D_pad), lambda i: (0, 0),    # w_dec: VMEM-resident
                         pipeline_mode=resident),
            pl.BlockSpec((1, D_pad), lambda i: (0, 0),        # b_dec
                         pipeline_mode=resident),
        ],
        out_specs=pl.BlockSpec((TB, D_pad), lambda i: (i, 0)),
        compiler_params=pltpu.CompilerParams(
            dimension_semantics=("parallel",),
            vmem_limit_bytes=vmem_limit,
        ),
        cost_estimate=cost,
    )(x_p, we_p, be_p, wd_p, bd_p)

    if needs_pad:
        return out_padded[:B, :D_in]
    return out_padded


def reference_forward(x, w_enc, b_enc, w_dec, b_dec):
    enc = x @ w_enc + b_enc.reshape(1, -1)
    dec = enc @ w_dec + b_dec.reshape(1, -1)
    return jnp.where(dec >= 0.0, dec, LEAKY_SLOPE * dec)


if __name__ == "__main__":
    # Small shapes consistent with the module: Linear(input_size, hidden_size).
    batch = 8
    input_size = 16
    hidden_size = 32

    key = jax.random.PRNGKey(0)
    kx, kwe, kbe, kwd, kbd = jax.random.split(key, 5)

    # Deterministic synthetic parameters (PyTorch-style uniform fan-in init).
    bound_e = 1.0 / jnp.sqrt(input_size)
    bound_d = 1.0 / jnp.sqrt(hidden_size)

    x = jax.random.normal(kx, (batch, input_size), dtype=jnp.float32)
    w_enc = jax.random.uniform(kwe, (input_size, hidden_size), jnp.float32,
                               -bound_e, bound_e)
    b_enc = jax.random.uniform(kbe, (1, hidden_size), jnp.float32,
                               -bound_e, bound_e)
    w_dec = jax.random.uniform(kwd, (hidden_size, input_size), jnp.float32,
                               -bound_d, bound_d)
    b_dec = jax.random.uniform(kbd, (1, input_size), jnp.float32,
                               -bound_d, bound_d)

    # Weight padding/casting is done once, outside the per-call path.
    params = prepare_autoencoder_params(w_enc, b_enc, w_dec, b_dec,
                                        compute_dtype=jnp.bfloat16)

    out = autoencoder_forward(x, params)
    out = jax.block_until_ready(out)

    ref = reference_forward(x, w_enc, b_enc, w_dec, b_dec)
    assert out.shape == (batch, input_size), out.shape
    # bf16 matmul operands with f32 accumulation -> compare vs f32 reference with
    # bf16-appropriate tolerance. (Use compute_dtype=jnp.float32 for exact parity.)
    assert jnp.allclose(out, ref, atol=5e-2, rtol=5e-2), "mismatch vs reference"

    print("KERNEL_OK")
</pallas_src>

<mosaic_0001>
module attributes {stable_mosaic.version = 11 : i64} {
  func.func @_autoencoder_kernel(%arg0: i32, %arg1: memref<16x128xbf16, #tpu.memory_space<vmem>>, %arg2: memref<128x128xbf16, #tpu.memory_space<vmem>>, %arg3: memref<1x128xf32, #tpu.memory_space<vmem>>, %arg4: memref<128x128xbf16, #tpu.memory_space<vmem>>, %arg5: memref<1x128xf32, #tpu.memory_space<vmem>>, %arg6: memref<16x128xf32, #tpu.memory_space<vmem>>) attributes {dimension_semantics = [#tpu.dimension_semantics<parallel>], iteration_bounds = array<i64: 1>, scalar_prefetch = 0 : i64, scratch_operands = 0 : i64, tpu.core_type = #tpu.core_type<tc>, window_params = [{transform_indices = @transform_0, window_bounds = array<i64: 16, 128>}, {pipeline_mode = #tpu.pipeline_mode<synchronous>, transform_indices = @transform_1, window_bounds = array<i64: 128, 128>}, {pipeline_mode = #tpu.pipeline_mode<synchronous>, transform_indices = @transform_2, window_bounds = array<i64: 1, 128>}, {pipeline_mode = #tpu.pipeline_mode<synchronous>, transform_indices = @transform_3, window_bounds = array<i64: 128, 128>}, {pipeline_mode = #tpu.pipeline_mode<synchronous>, transform_indices = @transform_4, window_bounds = array<i64: 1, 128>}, {transform_indices = @transform_5, window_bounds = array<i64: 16, 128>}]} {
    %c0 = arith.constant 0 : index
    %c0_0 = arith.constant 0 : index
    %0 = vector.load %arg1[%c0, %c0_0] : memref<16x128xbf16, #tpu.memory_space<vmem>>, vector<16x128xbf16>
    %c0_1 = arith.constant 0 : index
    %c0_2 = arith.constant 0 : index
    %1 = vector.load %arg2[%c0_1, %c0_2] : memref<128x128xbf16, #tpu.memory_space<vmem>>, vector<128x128xbf16>
    %cst = arith.constant dense<0.000000e+00> : vector<16x128xf32>
    %2 = tpu.matmul %0, %1, %cst {dimension_numbers = #tpu.dot_dimension_numbers<[1], [0], [0], [1], [0, 0, 1, 1], [], []>} : vector<16x128xbf16>, vector<128x128xbf16>, vector<16x128xf32> -> vector<16x128xf32>
    %c0_3 = arith.constant 0 : index
    %c0_4 = arith.constant 0 : index
    %3 = vector.load %arg3[%c0_3, %c0_4] : memref<1x128xf32, #tpu.memory_space<vmem>>, vector<1x128xf32>
    %4 = vector.broadcast %3 : vector<1x128xf32> to vector<16x128xf32>
    %5 = arith.addf %2, %4 : vector<16x128xf32>
    %6 = arith.truncf %5 : vector<16x128xf32> to vector<16x128xbf16>
    %c0_5 = arith.constant 0 : index
    %c0_6 = arith.constant 0 : index
    %7 = vector.load %arg4[%c0_5, %c0_6] : memref<128x128xbf16, #tpu.memory_space<vmem>>, vector<128x128xbf16>
    %cst_7 = arith.constant dense<0.000000e+00> : vector<16x128xf32>
    %8 = tpu.matmul %6, %7, %cst_7 {dimension_numbers = #tpu.dot_dimension_numbers<[1], [0], [0], [1], [0, 0, 1, 1], [], []>} : vector<16x128xbf16>, vector<128x128xbf16>, vector<16x128xf32> -> vector<16x128xf32>
    %c0_8 = arith.constant 0 : index
    %c0_9 = arith.constant 0 : index
    %9 = vector.load %arg5[%c0_8, %c0_9] : memref<1x128xf32, #tpu.memory_space<vmem>>, vector<1x128xf32>
    %10 = vector.broadcast %9 : vector<1x128xf32> to vector<16x128xf32>
    %11 = arith.addf %8, %10 : vector<16x128xf32>
    %cst_10 = arith.constant 0.000000e+00 : f32
    %12 = vector.broadcast %cst_10 : f32 to vector<16x128xf32>
    %13 = arith.cmpf oge, %11, %12 : vector<16x128xf32>
    %cst_11 = arith.constant 0.00999999977 : f32
    %14 = vector.broadcast %cst_11 : f32 to vector<16x128xf32>
    %15 = arith.mulf %14, %11 : vector<16x128xf32>
    %16 = arith.select %13, %11, %15 : vector<16x128xi1>, vector<16x128xf32>
    %c0_12 = arith.constant 0 : index
    %c0_13 = arith.constant 0 : index
    %17 = vector.load %arg6[%c0_12, %c0_13] : memref<16x128xf32, #tpu.memory_space<vmem>>, vector<16x128xf32>
    tpu.vector_store %arg6[%c0_12, %c0_13], %16 {strides = array<i32>} : memref<16x128xf32, #tpu.memory_space<vmem>>, vector<16x128xf32>,
    return
  }
  func.func @transform_0(%arg0: i32) -> (i32, i32) {
    %c0_i32 = arith.constant 0 : i32
    %c0_i32_0 = arith.constant 0 : i32
    return %arg0, %c0_i32 : i32, i32
  }
  func.func @transform_1(%arg0: i32) -> (i32, i32) {
    %c0_i32 = arith.constant 0 : i32
    %c0_i32_0 = arith.constant 0 : i32
    %c0_i32_1 = arith.constant 0 : i32
    return %c0_i32, %c0_i32_0 : i32, i32
  }
  func.func @transform_2(%arg0: i32) -> (i32, i32) {
    %c0_i32 = arith.constant 0 : i32
    %c0_i32_0 = arith.constant 0 : i32
    %c0_i32_1 = arith.constant 0 : i32
    return %c0_i32, %c0_i32_0 : i32, i32
  }
  func.func @transform_3(%arg0: i32) -> (i32, i32) {
    %c0_i32 = arith.constant 0 : i32
    %c0_i32_0 = arith.constant 0 : i32
    %c0_i32_1 = arith.constant 0 : i32
    return %c0_i32, %c0_i32_0 : i32, i32
  }
  func.func @transform_4(%arg0: i32) -> (i32, i32) {
    %c0_i32 = arith.constant 0 : i32
    %c0_i32_0 = arith.constant 0 : i32
    %c0_i32_1 = arith.constant 0 : i32
    return %c0_i32, %c0_i32_0 : i32, i32
  }
  func.func @transform_5(%arg0: i32) -> (i32, i32) {
    %c0_i32 = arith.constant 0 : i32
    %c0_i32_0 = arith.constant 0 : i32
    return %arg0, %c0_i32 : i32, i32
  }
}

</mosaic_0001>

<llo_original>
// kernel: tpu_custom_call.1
$region0: #{tpu_custom_call.1}
  #allocation0 [shape = 'u32[]', space=smem, size = 0x4, offset = 0x4, fixed_abs, tag = 'smem constant byte address 0x4 - core index']
  #allocation1 [shape = 'u32[144,128]{1,0:T(1,128)}', space=vmem, size = 0x12000, scoped, tag = 'internal scratch']
  %s0 = inlined_call_operand.hbm [shape: bf16[16,128], index: 0, kind: input, shape index: {}]
  %s1 = inlined_call_operand.hbm [shape: bf16[128,128], index: 1, kind: input, shape index: {}]
  %s2 = inlined_call_operand.vmem [shape: f32[1,128], index: 2, kind: input, shape index: {}]
  %s3 = inlined_call_operand.hbm [shape: bf16[128,128], index: 3, kind: input, shape index: {}]
  %s4 = inlined_call_operand.vmem [shape: f32[1,128], index: 4, kind: input, shape index: {}]
  %s5 = inlined_call_operand.hbm [shape: f32[16,128], index: 5, kind: output, shape index: {}]
  %s6 = sld [smem:[#allocation0]]
  $region42: #{tpu_custom_call.1} parent=0
    _
  %s8 = ssub.s32 1, %s6
  %s9 = scalar_select 0, %s8, %s6
  $region1: #{tpu_custom_call.1} parent=0
    #allocation2 [shape = 'u8[4096]{0}', space=vmem, size = 0x1000, scoped, tag = 'input window, operand 0, single buffered']
    #allocation3 [shape = 's32[1]{0}', space=sflag, size = 0x4, scoped, tag = 'scoped memory for tpu_custom_call.1']
    #allocation4 [shape = 's32[1]{0}', space=sflag, size = 0x4, scoped, tag = 'scoped memory for tpu_custom_call.1']
    #allocation5 [shape = 'u8[32768]{0}', space=vmem, size = 0x8000, scoped, tag = 'input window, operand 1, single buffered']
    #allocation6 [shape = 's32[1]{0}', space=sflag, size = 0x4, scoped, tag = 'scoped memory for tpu_custom_call.1']
    #allocation7 [shape = 'u8[32768]{0}', space=vmem, size = 0x8000, scoped, tag = 'input window, operand 3, single buffered']
    #allocation8 [shape = 'u8[8192]{0}', space=vmem, size = 0x2000, scoped, tag = 'output window, operand 0, single buffered']
    %10 = vsyncpa [#allocation3], 0
    %11 = vsyncpa [#allocation6], 0
    %12 = vsyncpa [#allocation4], 0
    // Predicated region
    $region2: #{tpu_custom_call.1} parent=1 // pred_check
      _
    $region3: #{tpu_custom_call.1} parent=1 // pred_check_branch
      %14 = sbr.rel (0) target = $region5
    $region4: #{tpu_custom_call.1} parent=1 // pred_region
      %s16 = ssub.s32 128, 128
      %17 = vsyncadd [#allocation3], %s16
      %s18 = sshll.u32 [#allocation2], 4
      %s19 = int_to_ptr.vmem [resolvable:$true] %s18
      %24 = dma.hbm_to_vmem [thread:$0]  %s0, 128, %s19, [#allocation3], 64, 64, 4
    $region5: #{tpu_custom_call.1} parent=1 // pred_fallthru
      _
    // Predicated region
    $region6: #{tpu_custom_call.1} parent=1 // pred_check
      _
    $region7: #{tpu_custom_call.1} parent=1 // pred_check_branch
      %26 = sbr.rel (0) target = $region9
    $region8: #{tpu_custom_call.1} parent=1 // pred_region
      %s28 = ssub.s32 1024, 1024
      %29 = vsyncadd [#allocation6], %s28
      %s30 = sshll.u32 [#allocation5], 4
      %s31 = int_to_ptr.vmem [resolvable:$true] %s30
      %36 = dma.hbm_to_vmem [thread:$0]  %s1, 1024, %s31, [#allocation6], 64, 64, 4
    $region9: #{tpu_custom_call.1} parent=1 // pred_fallthru
      _
    // Predicated region
    $region10: #{tpu_custom_call.1} parent=1 // pred_check
      _
    $region11: #{tpu_custom_call.1} parent=1 // pred_check_branch
      %38 = sbr.rel (0) target = $region13
    $region12: #{tpu_custom_call.1} parent=1 // pred_region
      _
    $region13: #{tpu_custom_call.1} parent=1 // pred_fallthru
      _
    // Predicated region
    $region14: #{tpu_custom_call.1} parent=1 // pred_check
      _
    $region15: #{tpu_custom_call.1} parent=1 // pred_check_branch
      %40 = sbr.rel (0) target = $region17
    $region16: #{tpu_custom_call.1} parent=1 // pred_region
      %s42 = ssub.s32 1024, 1024
      %43 = vsyncadd [#allocation6], %s42
      %s44 = sshll.u32 [#allocation7], 4
      %s45 = int_to_ptr.vmem [resolvable:$true] %s44
      %50 = dma.hbm_to_vmem [thread:$0]  %s3, 1024, %s45, [#allocation6], 64, 64, 4
    $region17: #{tpu_custom_call.1} parent=1 // pred_fallthru
      _
    // Predicated region
    $region18: #{tpu_custom_call.1} parent=1 // pred_check
      _
    $region19: #{tpu_custom_call.1} parent=1 // pred_check_branch
      %52 = sbr.rel (0) target = $region21
    $region20: #{tpu_custom_call.1} parent=1 // pred_region
      _
    $region21: #{tpu_custom_call.1} parent=1 // pred_fallthru
      _
    // Predicated region
    $region22: #{tpu_custom_call.1} parent=1 // pred_check
      _
    $region23: #{tpu_custom_call.1} parent=1 // pred_check_branch
      %54 = sbr.rel (0) target = $region25
    $region24: #{tpu_custom_call.1} parent=1 // pred_region
      %55 = dma.done [#allocation3], 128
    $region25: #{tpu_custom_call.1} parent=1 // pred_fallthru
      _
    // Predicated region
    $region26: #{tpu_custom_call.1} parent=1 // pred_check
      _
    $region27: #{tpu_custom_call.1} parent=1 // pred_check_branch
      %57 = sbr.rel (0) target = $region29
    $region28: #{tpu_custom_call.1} parent=1 // pred_region
      %58 = dma.done [#allocation6], 1024
    $region29: #{tpu_custom_call.1} parent=1 // pred_fallthru
      _
    // Predicated region
    $region30: #{tpu_custom_call.1} parent=1 // pred_check
      _
    $region31: #{tpu_custom_call.1} parent=1 // pred_check_branch
      %60 = sbr.rel (0) target = $region33
    $region32: #{tpu_custom_call.1} parent=1 // pred_region
      %61 = dma.done [#allocation6], 1024
    $region33: #{tpu_custom_call.1} parent=1 // pred_fallthru
      _
    %v63 = vld [vmem:[#allocation2] sm:$0xf]
    %v64 = vld [vmem:[#allocation2 + $0x4] sm:$0xf]
    %v65 = vld [vmem:[#allocation5] sm:$0xf]
    %v66 = vld [vmem:[#allocation5 + $0x4] sm:$0xf]
    %v67 = vld [vmem:[#allocation5 + $0x8] sm:$0xf]
    %v68 = vld [vmem:[#allocation5 + $0xc] sm:$0xf]
    %v69 = vld [vmem:[#allocation5 + $0x10] sm:$0xf]
    %v70 = vld [vmem:[#allocation5 + $0x14] sm:$0xf]
    %v71 = vld [vmem:[#allocation5 + $0x18] sm:$0xf]
    %v72 = vld [vmem:[#allocation5 + $0x1c] sm:$0xf]
    %v73 = vld [vmem:[#allocation5 + $0x20] sm:$0xf]
    %v74 = vld [vmem:[#allocation5 + $0x24] sm:$0xf]
    %v75 = vld [vmem:[#allocation5 + $0x28] sm:$0xf]
    %v76 = vld [vmem:[#allocation5 + $0x2c] sm:$0xf]
    %v77 = vld [vmem:[#allocation5 + $0x30] sm:$0xf]
    %v78 = vld [vmem:[#allocation5 + $0x34] sm:$0xf]
    %v79 = vld [vmem:[#allocation5 + $0x38] sm:$0xf]
    %v80 = vld [vmem:[#allocation5 + $0x3c] sm:$0xf]
    %v81 = vld [vmem:[%s2] sm:$0x1]
    %v83 = vlaneseq
    %v84 = vshrl.u32 %v83, 7
    %v85 = vsub.s32 0, %v84
    %v86 = vrot.slane %v81, %v85
    %v90 = vunpack.c.l.b16 %v63
    %v91 = vunpack.c.l.b16 %v64
    %v92 = vpack.c.b16 %v91, %v90
    %v110 = vunpack.c.l.b16 %v65
    %v111 = vunpack.c.l.b16 %v66
    %v112 = vunpack.c.l.b16 %v67
    %v113 = vunpack.c.l.b16 %v68
    %v114 = vunpack.c.l.b16 %v69
    %v115 = vunpack.c.l.b16 %v70
    %v116 = vunpack.c.l.b16 %v71
    %v117 = vunpack.c.l.b16 %v72
    %v118 = vunpack.c.l.b16 %v73
    %v119 = vunpack.c.l.b16 %v74
    %v120 = vunpack.c.l.b16 %v75
    %v121 = vunpack.c.l.b16 %v76
    %v122 = vunpack.c.l.b16 %v77
    %v123 = vunpack.c.l.b16 %v78
    %v124 = vunpack.c.l.b16 %v79
    %v125 = vunpack.c.l.b16 %v80
    %v126 = vpack.c.b16 %v111, %v110
    %v127 = vpack.c.b16 %v113, %v112
    %v128 = vpack.c.b16 %v115, %v114
    %v129 = vpack.c.b16 %v117, %v116
    %v130 = vpack.c.b16 %v119, %v118
    %v131 = vpack.c.b16 %v121, %v120
    %v132 = vpack.c.b16 %v123, %v122
    %v133 = vpack.c.b16 %v125, %v124
    %142 = vmatprep.subr.bf16.mxu0 0
    %143 = vmatpush1.bf16.msra.mxu0 %v126
    %144 = vmatprep.subr.bf16.mxu0 0
    %145 = vmatpush1.bf16.msra.mxu0 %v127
    %146 = vmatprep.subr.bf16.mxu0 0
    %147 = vmatpush1.bf16.msra.mxu0 %v128
    %148 = vmatprep.subr.bf16.mxu0 0
    %149 = vmatpush1.bf16.msra.mxu0 %v129
    %150 = vmatprep.subr.bf16.mxu0 0
    %151 = vmatpush1.bf16.msra.mxu0 %v130
    %152 = vmatprep.subr.bf16.mxu0 0
    %153 = vmatpush1.bf16.msra.mxu0 %v131
    %154 = vmatprep.subr.bf16.mxu0 0
    %155 = vmatpush1.bf16.msra.mxu0 %v132
    %156 = vmatprep.subr.bf16.mxu0 0
    %157 = vmatpush1.bf16.msra.mxu0 %v133
    %158 = vmatprep.subr.bf16.mxu0 0
    %159 = vmatpush1.bf16.msra.mxu0 0
    %160 = vmatprep.subr.bf16.mxu0 0
    %161 = vmatpush1.bf16.msra.mxu0 0
    %162 = vmatprep.subr.bf16.mxu0 0
    %163 = vmatpush1.bf16.msra.mxu0 0
    %164 = vmatprep.subr.bf16.mxu0 0
    %165 = vmatpush1.bf16.msra.mxu0 0
    %166 = vmatprep.subr.bf16.mxu0 0
    %167 = vmatpush1.bf16.msra.mxu0 0
    %168 = vmatprep.subr.bf16.mxu0 0
    %169 = vmatpush1.bf16.msra.mxu0 0
    %170 = vmatprep.subr.bf16.mxu0 0
    %171 = vmatpush1.bf16.msra.mxu0 0
    %172 = vmatprep.subr.bf16.mxu0 0
    %173 = vmatpush1.bf16.msra.mxu0 0
    %174 = vmatprep.mubr.bf16.mxu0 0
    %175 = vmatmul.mubr.bf16.gmra.mrb[0].mxu0 %v92
    %v176 = vpop.f32.mrb[0].mxu0
    %v177 = vadd.f32 %v86, %v176
    %v178 = vpop.f32.mrb[0].mxu0
    %v179 = vpop.f32.mrb[0].mxu0
    %v180 = vadd.f32 %v86, %v179
    %v181 = vpop.f32.mrb[0].mxu0
    %182 = vdwg.mxu0
    %v183 = vpack.c.bf16 %v180, %v177
    %v184 = vld [vmem:[#allocation7] sm:$0xf]
    %v185 = vld [vmem:[#allocation7 + $0x4] sm:$0xf]
    %v186 = vld [vmem:[#allocation7 + $0x8] sm:$0xf]
    %v187 = vld [vmem:[#allocation7 + $0xc] sm:$0xf]
    %v188 = vld [vmem:[#allocation7 + $0x10] sm:$0xf]
    %v189 = vld [vmem:[#allocation7 + $0x14] sm:$0xf]
    %v190 = vld [vmem:[#allocation7 + $0x18] sm:$0xf]
    %v191 = vld [vmem:[#allocation7 + $0x1c] sm:$0xf]
    %v192 = vld [vmem:[#allocation7 + $0x20] sm:$0xf]
    %v193 = vld [vmem:[#allocation7 + $0x24] sm:$0xf]
    %v194 = vld [vmem:[#allocation7 + $0x28] sm:$0xf]
    %v195 = vld [vmem:[#allocation7 + $0x2c] sm:$0xf]
    %v196 = vld [vmem:[#allocation7 + $0x30] sm:$0xf]
    %v197 = vld [vmem:[#allocation7 + $0x34] sm:$0xf]
    %v198 = vld [vmem:[#allocation7 + $0x38] sm:$0xf]
    %v199 = vld [vmem:[#allocation7 + $0x3c] sm:$0xf]
    %v200 = vld [vmem:[%s4] sm:$0x1]
    %v202 = vlaneseq
    %v203 = vshrl.u32 %v202, 7
    %v204 = vsub.s32 0, %v203
    %v205 = vrot.slane %v200, %v204
    %v223 = vunpack.c.l.b16 %v184
    %v224 = vunpack.c.l.b16 %v185
    %v225 = vunpack.c.l.b16 %v186
    %v226 = vunpack.c.l.b16 %v187
    %v227 = vunpack.c.l.b16 %v188
    %v228 = vunpack.c.l.b16 %v189
    %v229 = vunpack.c.l.b16 %v190
    %v230 = vunpack.c.l.b16 %v191
    %v231 = vunpack.c.l.b16 %v192
    %v232 = vunpack.c.l.b16 %v193
    %v233 = vunpack.c.l.b16 %v194
    %v234 = vunpack.c.l.b16 %v195
    %v235 = vunpack.c.l.b16 %v196
    %v236 = vunpack.c.l.b16 %v197
    %v237 = vunpack.c.l.b16 %v198
    %v238 = vunpack.c.l.b16 %v199
    %v239 = vpack.c.b16 %v224, %v223
    %v240 = vpack.c.b16 %v226, %v225
    %v241 = vpack.c.b16 %v228, %v227
    %v242 = vpack.c.b16 %v230, %v229
    %v243 = vpack.c.b16 %v232, %v231
    %v244 = vpack.c.b16 %v234, %v233
    %v245 = vpack.c.b16 %v236, %v235
    %v246 = vpack.c.b16 %v238, %v237
    %255 = vmatprep.subr.bf16.mxu0 0
    %256 = vmatpush1.bf16.msra.mxu0 %v239
    %257 = vmatprep.subr.bf16.mxu0 0
    %258 = vmatpush1.bf16.msra.mxu0 %v240
    %259 = vmatprep.subr.bf16.mxu0 0
    %260 = vmatpush1.bf16.msra.mxu0 %v241
    %261 = vmatprep.subr.bf16.mxu0 0
    %262 = vmatpush1.bf16.msra.mxu0 %v242
    %263 = vmatprep.subr.bf16.mxu0 0
    %264 = vmatpush1.bf16.msra.mxu0 %v243
    %265 = vmatprep.subr.bf16.mxu0 0
    %266 = vmatpush1.bf16.msra.mxu0 %v244
    %267 = vmatprep.subr.bf16.mxu0 0
    %268 = vmatpush1.bf16.msra.mxu0 %v245
    %269 = vmatprep.subr.bf16.mxu0 0
    %270 = vmatpush1.bf16.msra.mxu0 %v246
    %271 = vmatprep.subr.bf16.mxu0 0
    %272 = vmatpush1.bf16.msra.mxu0 0
    %273 = vmatprep.subr.bf16.mxu0 0
    %274 = vmatpush1.bf16.msra.mxu0 0
    %275 = vmatprep.subr.bf16.mxu0 0
    %276 = vmatpush1.bf16.msra.mxu0 0
    %277 = vmatprep.subr.bf16.mxu0 0
    %278 = vmatpush1.bf16.msra.mxu0 0
    %279 = vmatprep.subr.bf16.mxu0 0
    %280 = vmatpush1.bf16.msra.mxu0 0
    %281 = vmatprep.subr.bf16.mxu0 0
    %282 = vmatpush1.bf16.msra.mxu0 0
    %283 = vmatprep.subr.bf16.mxu0 0
    %284 = vmatpush1.bf16.msra.mxu0 0
    %285 = vmatprep.subr.bf16.mxu0 0
    %286 = vmatpush1.bf16.msra.mxu0 0
    %287 = vmatprep.mubr.bf16.mxu0 0
    %288 = vmatmul.mubr.bf16.gmra.mrb[0].mxu0 %v183
    %v289 = vpop.f32.mrb[0].mxu0
    %v290 = vadd.f32 %v205, %v289
    %v291 = vpop.f32.mrb[0].mxu0
    %v292 = vpop.f32.mrb[0].mxu0
    %v293 = vadd.f32 %v205, %v292
    %v294 = vpop.f32.mrb[0].mxu0
    %295 = vdwg.mxu0
    %vm296 = vcmp.ge.f32.partialorder %v290, 0.0
    %vm297 = vcmp.ge.f32.partialorder %v293, 0.0
    %v298 = vmul.f32 %v290, 0.01
    %v299 = vmul.f32 %v293, 0.01
    %v300 = vsel %vm296, %v290, %v298
    %v301 = vsel %vm297, %v293, %v299
    %302 = vst [vmem:[#allocation8] sm:$0xff] %v300
    %303 = vst [vmem:[#allocation8 + $0x8] sm:$0xff] %v301
    // Predicated region
    $region34: #{tpu_custom_call.1} parent=1 // pred_check
      _
    $region35: #{tpu_custom_call.1} parent=1 // pred_check_branch
      %305 = sbr.rel (0) target = $region37
    $region36: #{tpu_custom_call.1} parent=1 // pred_region
      %s307 = ssub.s32 256, 256
      %308 = vsyncadd [#allocation4], %s307
      %s309 = sshll.u32 [#allocation8], 4
      %s310 = int_to_ptr.vmem [resolvable:$true] %s309
      %315 = dma.vmem_to_hbm [thread:$0]  %s310, 256, %s5, [#allocation4], 128, 128, 8
    $region37: #{tpu_custom_call.1} parent=1 // pred_fallthru
      _
    // Predicated region
    $region38: #{tpu_custom_call.1} parent=1 // pred_check
      _
    $region39: #{tpu_custom_call.1} parent=1 // pred_check_branch
      %317 = sbr.rel (0) target = $region41
    $region40: #{tpu_custom_call.1} parent=1 // pred_region
      %318 = dma.done [#allocation4], 256
    $region41: #{tpu_custom_call.1} parent=1 // pred_fallthru
      _
    %319 = vsyncpa [#allocation3], 1
    %320 = vsyncpa [#allocation6], 1
    %321 = vsyncpa [#allocation4], 1

</llo_original>
